<compile_context>
chip_gen: v5e
topology: v5e:2x2
jax: 0.10.0
libtpu: 0.0.40
codegen_flags: <defaults>
</compile_context>

<pallas_src>
import jax
import jax.numpy as jnp
from jax import lax
from jax.experimental import pallas as pl
from jax.experimental.pallas import tpu as pltpu

# ----------------------------------------------------------------------------
# Static module structure
# ----------------------------------------------------------------------------
NTYPES = ["drug", "disease", "protein", "gene", "pathway"]
NTYPE_IDX = {nt: i for i, nt in enumerate(NTYPES)}

REL_SRC_DST = {
    "drug_drug": ("drug", "drug"),
    "drug_disease": ("drug", "disease"),
    "disease_disease": ("disease", "disease"),
    "drug_protein": ("drug", "protein"),
    "protein_protein": ("protein", "protein"),
    "protein_gene": ("protein", "gene"),
    "gene_gene": ("gene", "gene"),
    "gene_pathway": ("gene", "pathway"),
    "pathway_pathway": ("pathway", "pathway"),
    "pathway_disease": ("pathway", "disease"),
}

SUBNETS = {
    "drug_disease": ["drug_drug", "drug_disease", "disease_disease"],
    "drug_protein": ["drug_drug", "drug_protein", "protein_protein"],
    "protein_gene": ["protein_protein", "protein_gene", "gene_gene"],
    "gene_pathway": ["gene_gene", "gene_pathway", "pathway_pathway"],
    "pathway_disease": ["pathway_pathway", "pathway_disease", "disease_disease"],
}

SUBNET_ORDER = [
    ("drug_disease", ("drug", "disease")),
    ("drug_protein", ("drug", "protein")),
    ("protein_gene", ("protein", "gene")),
    ("gene_pathway", ("gene", "pathway")),
    ("pathway_disease", ("pathway", "disease")),
]

# Sizes
F_IN = 32
F_OUT = 32
N_PAD = 16          # every node type zero-padded to a common row count
B_ROWS_PAD = 8      # compact bias rows padded to a sublane multiple


def _build_problems():
    """Only the (subnet, dst) pairs whose result SubnetworkEncoder.forward keeps
    (new_h[ntype][0]) -- one problem per node type, in NTYPE order."""
    seen = set()
    problems = []
    for subnet, (t0, t1) in SUBNET_ORDER:
        for dst in (t0, t1):
            if dst in seen:
                continue  # module discards everything but the first embedding
            rels = [r for r in SUBNETS[subnet] if REL_SRC_DST[r][1] == dst]
            seen.add(dst)
            problems.append((dst, subnet, rels))
    problems.sort(key=lambda p: NTYPE_IDX[p[0]])  # fixed output row layout
    return problems


PROBLEMS = _build_problems()          # 5 problems (one per ntype)
NP_PROB = len(PROBLEMS)               # 5


def _build_contribs():
    """(problem, relation) contributions, grouped by SOURCE node type so stage-1
    can do one concatenated matmul per source and the XW row blocks for each
    source land contiguously."""
    raw = [(pi, subnet, rel, REL_SRC_DST[rel][0])
           for pi, (dst, subnet, rels) in enumerate(PROBLEMS)
           for rel in rels]
    raw.sort(key=lambda c: (NTYPE_IDX[c[3]], c[0]))
    return raw


CONTRIBS = _build_contribs()          # 9 (problem, relation) pairs
NC = len(CONTRIBS)                    # 9

# Per-source metadata (contributions are contiguous per source by construction).
SRC_C_START = []
SRC_NC = []
for _nt in NTYPES:
    _idxs = [c for c, (_, _, _, src) in enumerate(CONTRIBS) if src == _nt]
    SRC_C_START.append(_idxs[0])
    SRC_NC.append(len(_idxs))


# ----------------------------------------------------------------------------
# Pallas kernel: the entire SubnetworkEncoder forward in one body
# ----------------------------------------------------------------------------
def _make_encoder_kernel(node_counts):
    counts = [node_counts[dst] for (dst, _s, _r) in PROBLEMS]  # static per graph

    def kernel(x_ref, w_ref, a_ref, b_ref, alpha_ref, out_ref, xw_ref):
        # Stage 1: one MXU push per unique source node type. The source's
        # per-relation weights are concatenated along the output axis, so each
        # push is [16, 32] @ [32, n_c(s)*32] with f32 accumulation; the n_c(s)
        # 32-wide column blocks are stored as contiguous row blocks of the
        # f32 XW scratch (no bf16 re-quantization).
        for s in range(len(NTYPES)):
            c0, nc_s = SRC_C_START[s], SRC_NC[s]
            xw = jnp.dot(
                x_ref[s * N_PAD:(s + 1) * N_PAD, :],
                w_ref[:, c0 * F_OUT:(c0 + nc_s) * F_OUT],
                preferred_element_type=jnp.float32,
            )
            for j in range(nc_s):
                xw_ref[(c0 + j) * N_PAD:(c0 + j + 1) * N_PAD, :] = (
                    xw[:, j * F_OUT:(j + 1) * F_OUT])

        # Stage 2: one block-structured aggregation matmul over ALL
        # (problem, relation) contributions: [80, 144] @ [144, 32], f32.
        acc = jnp.dot(a_ref[...].astype(jnp.float32), xw_ref[...],
                      preferred_element_type=jnp.float32)

        # Epilogue per 16-row problem block: summed bias (broadcast from one
        # compact row) + PReLU (per-problem scalar slope from SMEM), then mask
        # padded rows to 0 so the raw slab is clean.
        row_ids = lax.broadcasted_iota(jnp.int32, (N_PAD, F_OUT), 0)
        for p in range(NP_PROB):
            blk = acc[p * N_PAD:(p + 1) * N_PAD, :] + b_ref[p:p + 1, :]
            alpha = alpha_ref[p]
            blk = jnp.where(blk > 0.0, blk, alpha * blk)
            if counts[p] < N_PAD:
                blk = jnp.where(row_ids < counts[p], blk, 0.0)
            out_ref[p * N_PAD:(p + 1) * N_PAD, :] = blk

    return kernel


def subnetwork_encoder_forward(x_all, a_big, w_flat, b_cmp, alpha_vec, node_counts):
    """SubnetworkEncoder.forward (bn=False, dp=False) on pre-packed operands.

    Returns the [5*N_PAD, F_OUT] f32 slab; row block NTYPE_IDX[nt] holds that
    node type's embeddings (padded rows are zero). Use slab_to_dict() if a
    per-ntype dict view is needed.
    """
    kernel = _make_encoder_kernel(node_counts)
    flops = 2 * (N_PAD * F_IN * NC * F_OUT                 # stage-1
                 + NP_PROB * N_PAD * NC * N_PAD * F_OUT)   # stage-2
    flops += 4 * NP_PROB * N_PAD * F_OUT                   # epilogue
    bytes_accessed = (x_all.size * 2 + w_flat.size * 2 + a_big.size * 2
                      + b_cmp.size * 4 + alpha_vec.size * 4
                      + NP_PROB * N_PAD * F_OUT * 4)
    return pl.pallas_call(
        kernel,
        out_shape=jax.ShapeDtypeStruct((NP_PROB * N_PAD, F_OUT), jnp.float32),
        in_specs=[
            pl.BlockSpec(memory_space=pltpu.MemorySpace.VMEM),   # x_all  [80,32] bf16
            pl.BlockSpec(memory_space=pltpu.MemorySpace.VMEM),   # w_flat [32,288] bf16
            pl.BlockSpec(memory_space=pltpu.MemorySpace.VMEM),   # a_big  [80,144] bf16
            pl.BlockSpec(memory_space=pltpu.MemorySpace.VMEM),   # bias   [8,32] f32
            pl.BlockSpec(memory_space=pltpu.MemorySpace.SMEM),   # alpha  (5,) f32
        ],
        out_specs=pl.BlockSpec(memory_space=pltpu.MemorySpace.VMEM),
        scratch_shapes=[pltpu.VMEM((NC * N_PAD, F_OUT), jnp.float32)],
        cost_estimate=pl.CostEstimate(flops=flops, transcendentals=0,
                                      bytes_accessed=bytes_accessed),
    )(x_all, w_flat, a_big, b_cmp, alpha_vec)


def slab_to_dict(slab, node_counts):
    """Zero-compute view helper: per-ntype dict of valid rows (verification /
    consumers that insist on the dict interface)."""
    return {dst: slab[pi * N_PAD: pi * N_PAD + node_counts[dst], :F_OUT]
            for pi, (dst, _s, _r) in enumerate(PROBLEMS)}


# ----------------------------------------------------------------------------
# Packing (done once, outside the hot forward path)
# ----------------------------------------------------------------------------
def normalize_adj(A):
    """DGL GraphConv norm='both' on raw adjacency A [N_src, N_dst] -> [N_dst, N_src]."""
    out_deg = jnp.maximum(A.sum(axis=1), 1.0)
    in_deg = jnp.maximum(A.sum(axis=0), 1.0)
    return (A / jnp.sqrt(out_deg)[:, None] / jnp.sqrt(in_deg)[None, :]).T


def pack_adjacency(adjs_raw, node_counts):
    """Block matrix A_big [5*N_PAD, 9*N_PAD]: block (p, c) is the normalized
    adjacency of contribution c if it belongs to problem p, else zeros.
    Column blocks follow the source-grouped CONTRIBS order."""
    a_big = jnp.zeros((NP_PROB * N_PAD, NC * N_PAD), jnp.float32)
    for c, (pi, _subnet, rel, src) in enumerate(CONTRIBS):
        dst = REL_SRC_DST[rel][1]
        an = normalize_adj(adjs_raw[rel])  # [n_dst, n_src]
        a_big = a_big.at[pi * N_PAD: pi * N_PAD + node_counts[dst],
                         c * N_PAD: c * N_PAD + node_counts[src]].set(an)
    return a_big.astype(jnp.bfloat16)


def pack_parameters(params):
    """Flat weight matrix [F_IN, NC*F_OUT] bf16 (no zero padding; each source's
    relation weights occupy contiguous columns), compact summed bias per problem
    [8, F_OUT] f32, and per-problem PReLU slope vector (5,) f32 (for SMEM)."""
    w_flat = jnp.zeros((F_IN, NC * F_OUT), jnp.float32)
    b_cmp = jnp.zeros((B_ROWS_PAD, F_OUT), jnp.float32)
    for c, (pi, subnet, rel, _src) in enumerate(CONTRIBS):
        w_flat = w_flat.at[:, c * F_OUT:(c + 1) * F_OUT].set(params[subnet]["w"][rel])
        b_cmp = b_cmp.at[pi, :].add(params[subnet]["b"][rel])
    alpha_vec = jnp.array([params[subnet]["alpha"][0]
                           for (_dst, subnet, _rels) in PROBLEMS], jnp.float32)
    return w_flat.astype(jnp.bfloat16), b_cmp, alpha_vec


def pack_features(h, node_counts):
    """Stack the 5 node-type feature matrices once (each copied exactly once)."""
    x_all = jnp.zeros((len(NTYPES) * N_PAD, F_IN), jnp.float32)
    for i, nt in enumerate(NTYPES):
        x_all = x_all.at[i * N_PAD: i * N_PAD + node_counts[nt], :].set(h[nt])
    return x_all.astype(jnp.bfloat16)


# ----------------------------------------------------------------------------
# Pure-JAX f32 reference: literal transcription of the PyTorch module
# ----------------------------------------------------------------------------
def reference_forward(params, adjs_raw, h):
    def node_emb(sp, rels):
        by_dst = {}
        for rel in rels:
            _, dst = REL_SRC_DST[rel]
            by_dst.setdefault(dst, []).append(rel)
        out = {}
        for dst, rel_list in by_dst.items():
            acc = 0.0
            for rel in rel_list:
                src, _ = REL_SRC_DST[rel]
                An = normalize_adj(adjs_raw[rel])
                acc = acc + An @ (h[src] @ sp["w"][rel]) + sp["b"][rel]
            out[dst] = jnp.where(acc > 0, acc, sp["alpha"][0] * acc)
        return out

    new_h = {nt: [] for nt in NTYPES}
    for subnet, (t0, t1) in SUBNET_ORDER:
        h_ = node_emb(params[subnet], SUBNETS[subnet])
        new_h[t0].append(h_[t0])
        new_h[t1].append(h_[t1])
    return {nt: new_h[nt][0] for nt in NTYPES}


# ----------------------------------------------------------------------------
# Main
# ----------------------------------------------------------------------------
if __name__ == "__main__":
    node_counts = {"drug": 12, "disease": 10, "protein": 14, "gene": 9, "pathway": 11}

    keys = iter(jax.random.split(jax.random.PRNGKey(0), 128))

    # input node features h[ntype]: [N_ntype, in_feats]
    h = {nt: jax.random.normal(next(keys), (node_counts[nt], F_IN), jnp.float32)
         for nt in NTYPES}

    # random binary adjacencies per relation, A[rel]: [N_src, N_dst]
    adjs_raw = {}
    for rel, (src, dst) in REL_SRC_DST.items():
        a = jax.random.uniform(next(keys), (node_counts[src], node_counts[dst]))
        adjs_raw[rel] = (a < 0.3).astype(jnp.float32)

    # parameters: xavier-normal weights, small random bias, PReLU slope 0.25.
    xav_std = (2.0 / (F_IN + F_OUT)) ** 0.5
    params = {}
    for subnet, rels in SUBNETS.items():
        params[subnet] = {
            "w": {rel: xav_std * jax.random.normal(next(keys), (F_IN, F_OUT),
                                                   jnp.float32) for rel in rels},
            "b": {rel: 0.1 * jax.random.normal(next(keys), (F_OUT,), jnp.float32)
                  for rel in rels},
            "alpha": jnp.array([0.25], jnp.float32),
        }
        # TODO(synk): BatchNorm1d / Dropout params exist in __init__ but are
        # identity on the default (bn=False, dp=False) forward path;
        # SemanticAttention is constructed but never called by forward.

    # one-time packing of graph structure + parameters
    a_big = pack_adjacency(adjs_raw, node_counts)
    w_flat, b_cmp, alpha_vec = pack_parameters(params)
    # per-forward packing of node features (each feature matrix copied once)
    x_all = pack_features(h, node_counts)

    # run the single fused Pallas kernel
    slab = subnetwork_encoder_forward(x_all, a_big, w_flat, b_cmp, alpha_vec,
                                      node_counts)
    slab = jax.block_until_ready(slab)
    out = slab_to_dict(slab, node_counts)

    # sanity check against pure-f32 reference (bf16 inputs, f32 accumulate)
    ref = reference_forward(params, adjs_raw, h)
    for nt in NTYPES:
        assert out[nt].shape == (node_counts[nt], F_OUT), (nt, out[nt].shape)
        err = float(jnp.max(jnp.abs(out[nt] - ref[nt])))
        tol = 5e-2 + 2e-2 * float(jnp.max(jnp.abs(ref[nt])))
        assert err < tol, (nt, err, tol)

    # padded rows of the slab must be exactly zero (masked in-kernel)
    for pi, (dst, _s, _r) in enumerate(PROBLEMS):
        pad = slab[pi * N_PAD + node_counts[dst]:(pi + 1) * N_PAD, :]
        assert float(jnp.max(jnp.abs(pad))) == 0.0, (dst, "padded rows not zero")

    print("KERNEL_OK")
</pallas_src>

<mosaic_0001>
module attributes {stable_mosaic.version = 11 : i64} {
  func.func @kernel(%arg0: memref<80x32xbf16, #tpu.memory_space<vmem>>, %arg1: memref<32x288xbf16, #tpu.memory_space<vmem>>, %arg2: memref<80x144xbf16, #tpu.memory_space<vmem>>, %arg3: memref<8x32xf32, #tpu.memory_space<vmem>>, %arg4: memref<5xf32, #tpu.memory_space<smem>>, %arg5: memref<80x32xf32, #tpu.memory_space<vmem>>, %arg6: memref<144x32xf32, #tpu.memory_space<vmem>>) attributes {dimension_semantics = [], scalar_prefetch = 0 : i64, scratch_operands = 1 : i64, tpu.core_type = #tpu.core_type<tc>} {
    %c0 = arith.constant 0 : index
    %c0_0 = arith.constant 0 : index
    %0 = vector.load %arg0[%c0, %c0_0] : memref<80x32xbf16, #tpu.memory_space<vmem>>, vector<16x32xbf16>
    %c0_1 = arith.constant 0 : index
    %c0_2 = arith.constant 0 : index
    %1 = vector.load %arg1[%c0_1, %c0_2] : memref<32x288xbf16, #tpu.memory_space<vmem>>, vector<32x96xbf16>
    %cst = arith.constant dense<0.000000e+00> : vector<16x96xf32>
    %2 = tpu.matmul %0, %1, %cst {dimension_numbers = #tpu.dot_dimension_numbers<[1], [0], [0], [1], [0, 0, 1, 1], [], []>} : vector<16x32xbf16>, vector<32x96xbf16>, vector<16x96xf32> -> vector<16x96xf32>
    %3 = vector.extract_strided_slice %2 {offsets = [0, 0], sizes = [16, 32], strides = [1, 1]} : vector<16x96xf32> to vector<16x32xf32>
    %c0_3 = arith.constant 0 : index
    %c0_4 = arith.constant 0 : index
    %4 = vector.load %arg6[%c0_3, %c0_4] : memref<144x32xf32, #tpu.memory_space<vmem>>, vector<16x32xf32>
    tpu.vector_store %arg6[%c0_3, %c0_4], %3 {strides = array<i32>} : memref<144x32xf32, #tpu.memory_space<vmem>>, vector<16x32xf32>,
    %5 = vector.extract_strided_slice %2 {offsets = [0, 32], sizes = [16, 32], strides = [1, 1]} : vector<16x96xf32> to vector<16x32xf32>
    %c16 = arith.constant 16 : index
    %c0_5 = arith.constant 0 : index
    %6 = vector.load %arg6[%c16, %c0_5] : memref<144x32xf32, #tpu.memory_space<vmem>>, vector<16x32xf32>
    tpu.vector_store %arg6[%c16, %c0_5], %5 {strides = array<i32>} : memref<144x32xf32, #tpu.memory_space<vmem>>, vector<16x32xf32>,
    %7 = vector.extract_strided_slice %2 {offsets = [0, 64], sizes = [16, 32], strides = [1, 1]} : vector<16x96xf32> to vector<16x32xf32>
    %c32 = arith.constant 32 : index
    %c0_6 = arith.constant 0 : index
    %8 = vector.load %arg6[%c32, %c0_6] : memref<144x32xf32, #tpu.memory_space<vmem>>, vector<16x32xf32>
    tpu.vector_store %arg6[%c32, %c0_6], %7 {strides = array<i32>} : memref<144x32xf32, #tpu.memory_space<vmem>>, vector<16x32xf32>,
    %c16_7 = arith.constant 16 : index
    %c0_8 = arith.constant 0 : index
    %9 = vector.load %arg0[%c16_7, %c0_8] : memref<80x32xbf16, #tpu.memory_space<vmem>>, vector<16x32xbf16>
    %c0_9 = arith.constant 0 : index
    %c96 = arith.constant 96 : index
    %10 = vector.load %arg1[%c0_9, %c96] : memref<32x288xbf16, #tpu.memory_space<vmem>>, vector<32x32xbf16>
    %cst_10 = arith.constant dense<0.000000e+00> : vector<16x32xf32>
    %11 = tpu.matmul %9, %10, %cst_10 {dimension_numbers = #tpu.dot_dimension_numbers<[1], [0], [0], [1], [0, 0, 1, 1], [], []>} : vector<16x32xbf16>, vector<32x32xbf16>, vector<16x32xf32> -> vector<16x32xf32>
    %c48 = arith.constant 48 : index
    %c0_11 = arith.constant 0 : index
    %12 = vector.load %arg6[%c48, %c0_11] : memref<144x32xf32, #tpu.memory_space<vmem>>, vector<16x32xf32>
    tpu.vector_store %arg6[%c48, %c0_11], %11 {strides = array<i32>} : memref<144x32xf32, #tpu.memory_space<vmem>>, vector<16x32xf32>,
    %c32_12 = arith.constant 32 : index
    %c0_13 = arith.constant 0 : index
    %13 = vector.load %arg0[%c32_12, %c0_13] : memref<80x32xbf16, #tpu.memory_space<vmem>>, vector<16x32xbf16>
    %c0_14 = arith.constant 0 : index
    %c128 = arith.constant 128 : index
    %14 = vector.load %arg1[%c0_14, %c128] : memref<32x288xbf16, #tpu.memory_space<vmem>>, vector<32x64xbf16>
    %cst_15 = arith.constant dense<0.000000e+00> : vector<16x64xf32>
    %15 = tpu.matmul %13, %14, %cst_15 {dimension_numbers = #tpu.dot_dimension_numbers<[1], [0], [0], [1], [0, 0, 1, 1], [], []>} : vector<16x32xbf16>, vector<32x64xbf16>, vector<16x64xf32> -> vector<16x64xf32>
    %16 = vector.extract_strided_slice %15 {offsets = [0, 0], sizes = [16, 32], strides = [1, 1]} : vector<16x64xf32> to vector<16x32xf32>
    %c64 = arith.constant 64 : index
    %c0_16 = arith.constant 0 : index
    %17 = vector.load %arg6[%c64, %c0_16] : memref<144x32xf32, #tpu.memory_space<vmem>>, vector<16x32xf32>
    tpu.vector_store %arg6[%c64, %c0_16], %16 {strides = array<i32>} : memref<144x32xf32, #tpu.memory_space<vmem>>, vector<16x32xf32>,
    %18 = vector.extract_strided_slice %15 {offsets = [0, 32], sizes = [16, 32], strides = [1, 1]} : vector<16x64xf32> to vector<16x32xf32>
    %c80 = arith.constant 80 : index
    %c0_17 = arith.constant 0 : index
    %19 = vector.load %arg6[%c80, %c0_17] : memref<144x32xf32, #tpu.memory_space<vmem>>, vector<16x32xf32>
    tpu.vector_store %arg6[%c80, %c0_17], %18 {strides = array<i32>} : memref<144x32xf32, #tpu.memory_space<vmem>>, vector<16x32xf32>,
    %c48_18 = arith.constant 48 : index
    %c0_19 = arith.constant 0 : index
    %20 = vector.load %arg0[%c48_18, %c0_19] : memref<80x32xbf16, #tpu.memory_space<vmem>>, vector<16x32xbf16>
    %c0_20 = arith.constant 0 : index
    %c192 = arith.constant 192 : index
    %21 = vector.load %arg1[%c0_20, %c192] : memref<32x288xbf16, #tpu.memory_space<vmem>>, vector<32x64xbf16>
    %cst_21 = arith.constant dense<0.000000e+00> : vector<16x64xf32>
    %22 = tpu.matmul %20, %21, %cst_21 {dimension_numbers = #tpu.dot_dimension_numbers<[1], [0], [0], [1], [0, 0, 1, 1], [], []>} : vector<16x32xbf16>, vector<32x64xbf16>, vector<16x64xf32> -> vector<16x64xf32>
    %23 = vector.extract_strided_slice %22 {offsets = [0, 0], sizes = [16, 32], strides = [1, 1]} : vector<16x64xf32> to vector<16x32xf32>
    %c96_22 = arith.constant 96 : index
    %c0_23 = arith.constant 0 : index
    %24 = vector.load %arg6[%c96_22, %c0_23] : memref<144x32xf32, #tpu.memory_space<vmem>>, vector<16x32xf32>
    tpu.vector_store %arg6[%c96_22, %c0_23], %23 {strides = array<i32>} : memref<144x32xf32, #tpu.memory_space<vmem>>, vector<16x32xf32>,
    %25 = vector.extract_strided_slice %22 {offsets = [0, 32], sizes = [16, 32], strides = [1, 1]} : vector<16x64xf32> to vector<16x32xf32>
    %c112 = arith.constant 112 : index
    %c0_24 = arith.constant 0 : index
    %26 = vector.load %arg6[%c112, %c0_24] : memref<144x32xf32, #tpu.memory_space<vmem>>, vector<16x32xf32>
    tpu.vector_store %arg6[%c112, %c0_24], %25 {strides = array<i32>} : memref<144x32xf32, #tpu.memory_space<vmem>>, vector<16x32xf32>,
    %c64_25 = arith.constant 64 : index
    %c0_26 = arith.constant 0 : index
    %27 = vector.load %arg0[%c64_25, %c0_26] : memref<80x32xbf16, #tpu.memory_space<vmem>>, vector<16x32xbf16>
    %c0_27 = arith.constant 0 : index
    %c256 = arith.constant 256 : index
    %28 = vector.load %arg1[%c0_27, %c256] : memref<32x288xbf16, #tpu.memory_space<vmem>>, vector<32x32xbf16>
    %cst_28 = arith.constant dense<0.000000e+00> : vector<16x32xf32>
    %29 = tpu.matmul %27, %28, %cst_28 {dimension_numbers = #tpu.dot_dimension_numbers<[1], [0], [0], [1], [0, 0, 1, 1], [], []>} : vector<16x32xbf16>, vector<32x32xbf16>, vector<16x32xf32> -> vector<16x32xf32>
    %c128_29 = arith.constant 128 : index
    %c0_30 = arith.constant 0 : index
    %30 = vector.load %arg6[%c128_29, %c0_30] : memref<144x32xf32, #tpu.memory_space<vmem>>, vector<16x32xf32>
    tpu.vector_store %arg6[%c128_29, %c0_30], %29 {strides = array<i32>} : memref<144x32xf32, #tpu.memory_space<vmem>>, vector<16x32xf32>,
    %c0_31 = arith.constant 0 : index
    %c0_32 = arith.constant 0 : index
    %31 = vector.load %arg2[%c0_31, %c0_32] : memref<80x144xbf16, #tpu.memory_space<vmem>>, vector<80x144xbf16>
    %32 = arith.extf %31 : vector<80x144xbf16> to vector<80x144xf32>
    %c0_33 = arith.constant 0 : index
    %c0_34 = arith.constant 0 : index
    %33 = vector.load %arg6[%c0_33, %c0_34] : memref<144x32xf32, #tpu.memory_space<vmem>>, vector<144x32xf32>
    %cst_35 = arith.constant dense<0.000000e+00> : vector<80x32xf32>
    %34 = tpu.matmul %32, %33, %cst_35 {dimension_numbers = #tpu.dot_dimension_numbers<[1], [0], [0], [1], [0, 0, 1, 1], [], []>} : vector<80x144xf32>, vector<144x32xf32>, vector<80x32xf32> -> vector<80x32xf32>
    %35 = tpu.iota {dimensions = array<i32: 0>} : vector<16x32xi32>
    %36 = vector.extract_strided_slice %34 {offsets = [0, 0], sizes = [16, 32], strides = [1, 1]} : vector<80x32xf32> to vector<16x32xf32>
    %c0_36 = arith.constant 0 : index
    %c0_37 = arith.constant 0 : index
    %37 = vector.load %arg3[%c0_36, %c0_37] : memref<8x32xf32, #tpu.memory_space<vmem>>, vector<1x32xf32>
    %38 = vector.broadcast %37 : vector<1x32xf32> to vector<16x32xf32>
    %39 = arith.addf %36, %38 : vector<16x32xf32>
    %c0_38 = arith.constant 0 : index
    %40 = memref.load %arg4[%c0_38] : memref<5xf32, #tpu.memory_space<smem>>
    %cst_39 = arith.constant 0.000000e+00 : f32
    %41 = vector.broadcast %cst_39 : f32 to vector<16x32xf32>
    %42 = arith.cmpf ogt, %39, %41 : vector<16x32xf32>
    %43 = vector.broadcast %40 : f32 to vector<16x32xf32>
    %44 = arith.mulf %43, %39 : vector<16x32xf32>
    %45 = arith.select %42, %39, %44 : vector<16x32xi1>, vector<16x32xf32>
    %c12_i32 = arith.constant 12 : i32
    %46 = vector.broadcast %c12_i32 : i32 to vector<16x32xi32>
    %47 = arith.cmpi slt, %35, %46 : vector<16x32xi32>
    %cst_40 = arith.constant 0.000000e+00 : f32
    %48 = vector.broadcast %cst_40 : f32 to vector<16x32xf32>
    %49 = arith.select %47, %45, %48 : vector<16x32xi1>, vector<16x32xf32>
    %c0_41 = arith.constant 0 : index
    %c0_42 = arith.constant 0 : index
    %50 = vector.load %arg5[%c0_41, %c0_42] : memref<80x32xf32, #tpu.memory_space<vmem>>, vector<16x32xf32>
    tpu.vector_store %arg5[%c0_41, %c0_42], %49 {strides = array<i32>} : memref<80x32xf32, #tpu.memory_space<vmem>>, vector<16x32xf32>,
    %51 = vector.extract_strided_slice %34 {offsets = [16, 0], sizes = [16, 32], strides = [1, 1]} : vector<80x32xf32> to vector<16x32xf32>
    %c1 = arith.constant 1 : index
    %c0_43 = arith.constant 0 : index
    %52 = vector.load %arg3[%c1, %c0_43] : memref<8x32xf32, #tpu.memory_space<vmem>>, vector<1x32xf32>
    %53 = vector.broadcast %52 : vector<1x32xf32> to vector<16x32xf32>
    %54 = arith.addf %51, %53 : vector<16x32xf32>
    %c1_44 = arith.constant 1 : index
    %55 = memref.load %arg4[%c1_44] : memref<5xf32, #tpu.memory_space<smem>>
    %cst_45 = arith.constant 0.000000e+00 : f32
    %56 = vector.broadcast %cst_45 : f32 to vector<16x32xf32>
    %57 = arith.cmpf ogt, %54, %56 : vector<16x32xf32>
    %58 = vector.broadcast %55 : f32 to vector<16x32xf32>
    %59 = arith.mulf %58, %54 : vector<16x32xf32>
    %60 = arith.select %57, %54, %59 : vector<16x32xi1>, vector<16x32xf32>
    %c10_i32 = arith.constant 10 : i32
    %61 = vector.broadcast %c10_i32 : i32 to vector<16x32xi32>
    %62 = arith.cmpi slt, %35, %61 : vector<16x32xi32>
    %cst_46 = arith.constant 0.000000e+00 : f32
    %63 = vector.broadcast %cst_46 : f32 to vector<16x32xf32>
    %64 = arith.select %62, %60, %63 : vector<16x32xi1>, vector<16x32xf32>
    %c16_47 = arith.constant 16 : index
    %c0_48 = arith.constant 0 : index
    %65 = vector.load %arg5[%c16_47, %c0_48] : memref<80x32xf32, #tpu.memory_space<vmem>>, vector<16x32xf32>
    tpu.vector_store %arg5[%c16_47, %c0_48], %64 {strides = array<i32>} : memref<80x32xf32, #tpu.memory_space<vmem>>, vector<16x32xf32>,
    %66 = vector.extract_strided_slice %34 {offsets = [32, 0], sizes = [16, 32], strides = [1, 1]} : vector<80x32xf32> to vector<16x32xf32>
    %c2 = arith.constant 2 : index
    %c0_49 = arith.constant 0 : index
    %67 = vector.load %arg3[%c2, %c0_49] : memref<8x32xf32, #tpu.memory_space<vmem>>, vector<1x32xf32>
    %68 = vector.broadcast %67 : vector<1x32xf32> to vector<16x32xf32>
    %69 = arith.addf %66, %68 : vector<16x32xf32>
    %c2_50 = arith.constant 2 : index
    %70 = memref.load %arg4[%c2_50] : memref<5xf32, #tpu.memory_space<smem>>
    %cst_51 = arith.constant 0.000000e+00 : f32
    %71 = vector.broadcast %cst_51 : f32 to vector<16x32xf32>
    %72 = arith.cmpf ogt, %69, %71 : vector<16x32xf32>
    %73 = vector.broadcast %70 : f32 to vector<16x32xf32>
    %74 = arith.mulf %73, %69 : vector<16x32xf32>
    %75 = arith.select %72, %69, %74 : vector<16x32xi1>, vector<16x32xf32>
    %c14_i32 = arith.constant 14 : i32
    %76 = vector.broadcast %c14_i32 : i32 to vector<16x32xi32>
    %77 = arith.cmpi slt, %35, %76 : vector<16x32xi32>
    %cst_52 = arith.constant 0.000000e+00 : f32
    %78 = vector.broadcast %cst_52 : f32 to vector<16x32xf32>
    %79 = arith.select %77, %75, %78 : vector<16x32xi1>, vector<16x32xf32>
    %c32_53 = arith.constant 32 : index
    %c0_54 = arith.constant 0 : index
    %80 = vector.load %arg5[%c32_53, %c0_54] : memref<80x32xf32, #tpu.memory_space<vmem>>, vector<16x32xf32>
    tpu.vector_store %arg5[%c32_53, %c0_54], %79 {strides = array<i32>} : memref<80x32xf32, #tpu.memory_space<vmem>>, vector<16x32xf32>,
    %81 = vector.extract_strided_slice %34 {offsets = [48, 0], sizes = [16, 32], strides = [1, 1]} : vector<80x32xf32> to vector<16x32xf32>
    %c3 = arith.constant 3 : index
    %c0_55 = arith.constant 0 : index
    %82 = vector.load %arg3[%c3, %c0_55] : memref<8x32xf32, #tpu.memory_space<vmem>>, vector<1x32xf32>
    %83 = vector.broadcast %82 : vector<1x32xf32> to vector<16x32xf32>
    %84 = arith.addf %81, %83 : vector<16x32xf32>
    %c3_56 = arith.constant 3 : index
    %85 = memref.load %arg4[%c3_56] : memref<5xf32, #tpu.memory_space<smem>>
    %cst_57 = arith.constant 0.000000e+00 : f32
    %86 = vector.broadcast %cst_57 : f32 to vector<16x32xf32>
    %87 = arith.cmpf ogt, %84, %86 : vector<16x32xf32>
    %88 = vector.broadcast %85 : f32 to vector<16x32xf32>
    %89 = arith.mulf %88, %84 : vector<16x32xf32>
    %90 = arith.select %87, %84, %89 : vector<16x32xi1>, vector<16x32xf32>
    %c9_i32 = arith.constant 9 : i32
    %91 = vector.broadcast %c9_i32 : i32 to vector<16x32xi32>
    %92 = arith.cmpi slt, %35, %91 : vector<16x32xi32>
    %cst_58 = arith.constant 0.000000e+00 : f32
    %93 = vector.broadcast %cst_58 : f32 to vector<16x32xf32>
    %94 = arith.select %92, %90, %93 : vector<16x32xi1>, vector<16x32xf32>
    %c48_59 = arith.constant 48 : index
    %c0_60 = arith.constant 0 : index
    %95 = vector.load %arg5[%c48_59, %c0_60] : memref<80x32xf32, #tpu.memory_space<vmem>>, vector<16x32xf32>
    tpu.vector_store %arg5[%c48_59, %c0_60], %94 {strides = array<i32>} : memref<80x32xf32, #tpu.memory_space<vmem>>, vector<16x32xf32>,
    %96 = vector.extract_strided_slice %34 {offsets = [64, 0], sizes = [16, 32], strides = [1, 1]} : vector<80x32xf32> to vector<16x32xf32>
    %c4 = arith.constant 4 : index
    %c0_61 = arith.constant 0 : index
    %97 = vector.load %arg3[%c4, %c0_61] : memref<8x32xf32, #tpu.memory_space<vmem>>, vector<1x32xf32>
    %98 = vector.broadcast %97 : vector<1x32xf32> to vector<16x32xf32>
    %99 = arith.addf %96, %98 : vector<16x32xf32>
    %c4_62 = arith.constant 4 : index
    %100 = memref.load %arg4[%c4_62] : memref<5xf32, #tpu.memory_space<smem>>
    %cst_63 = arith.constant 0.000000e+00 : f32
    %101 = vector.broadcast %cst_63 : f32 to vector<16x32xf32>
    %102 = arith.cmpf ogt, %99, %101 : vector<16x32xf32>
    %103 = vector.broadcast %100 : f32 to vector<16x32xf32>
    %104 = arith.mulf %103, %99 : vector<16x32xf32>
    %105 = arith.select %102, %99, %104 : vector<16x32xi1>, vector<16x32xf32>
    %c11_i32 = arith.constant 11 : i32
    %106 = vector.broadcast %c11_i32 : i32 to vector<16x32xi32>
    %107 = arith.cmpi slt, %35, %106 : vector<16x32xi32>
    %cst_64 = arith.constant 0.000000e+00 : f32
    %108 = vector.broadcast %cst_64 : f32 to vector<16x32xf32>
    %109 = arith.select %107, %105, %108 : vector<16x32xi1>, vector<16x32xf32>
    %c64_65 = arith.constant 64 : index
    %c0_66 = arith.constant 0 : index
    %110 = vector.load %arg5[%c64_65, %c0_66] : memref<80x32xf32, #tpu.memory_space<vmem>>, vector<16x32xf32>
    tpu.vector_store %arg5[%c64_65, %c0_66], %109 {strides = array<i32>} : memref<80x32xf32, #tpu.memory_space<vmem>>, vector<16x32xf32>,
    return
  }
}

</mosaic_0001>

<llo_original>
// kernel: tpu_custom_call.1
$region0: #{tpu_custom_call.1}
  #allocation0 [shape = 'u32[]', space=smem, size = 0x4, offset = 0x4, fixed_abs, tag = 'smem constant byte address 0x4 - core index']
  #allocation1 [shape = 'u32[72,128]{1,0:T(1,128)}', space=vmem, size = 0x9000, scoped, tag = 'internal scratch']
  #allocation2 [shape = 'f32[144,32]{1,0:T(8,128)}', space=vmem, size = 0x12000, scoped, tag = 'scratch operand']
  %s0 = inlined_call_operand.vmem [shape: bf16[80,32], index: 0, kind: input, shape index: {}]
  %s1 = inlined_call_operand.vmem [shape: bf16[32,288], index: 1, kind: input, shape index: {}]
  %s2 = inlined_call_operand.vmem [shape: bf16[80,144], index: 2, kind: input, shape index: {}]
  %s3 = inlined_call_operand.vmem [shape: f32[8,32], index: 3, kind: input, shape index: {}]
  %s4 = inlined_call_operand.vmem [shape: f32[5], index: 4, kind: input, shape index: {}]
  %s5 = inlined_call_operand.vmem [shape: f32[80,32], index: 5, kind: output, shape index: {}]
  %s6 = sld [smem:[#allocation0]]
  $region34: #{tpu_custom_call.1} parent=0
    _
  %s8 = ssub.s32 1, %s6
  %s9 = scalar_select 0, %s8, %s6
  $region1: #{tpu_custom_call.1} parent=0
    #allocation3 [shape = 'u8[512]{0}', space=smem, size = 0x200, scoped, tag = 'input window, operand 4, single buffered']
    #allocation4 [shape = 's32[1]{0}', space=sflag, size = 0x4, scoped, tag = 'scoped memory for tpu_custom_call.1']
    %10 = vsyncpa [#allocation4], 0
    // Predicated region
    $region2: #{tpu_custom_call.1} parent=1 // pred_check
      _
    $region3: #{tpu_custom_call.1} parent=1 // pred_check_branch
      %12 = sbr.rel (0) target = $region5
    $region4: #{tpu_custom_call.1} parent=1 // pred_region
      _
    $region5: #{tpu_custom_call.1} parent=1 // pred_fallthru
      _
    // Predicated region
    $region6: #{tpu_custom_call.1} parent=1 // pred_check
      _
    $region7: #{tpu_custom_call.1} parent=1 // pred_check_branch
      %14 = sbr.rel (0) target = $region9
    $region8: #{tpu_custom_call.1} parent=1 // pred_region
      _
    $region9: #{tpu_custom_call.1} parent=1 // pred_fallthru
      _
    // Predicated region
    $region10: #{tpu_custom_call.1} parent=1 // pred_check
      _
    $region11: #{tpu_custom_call.1} parent=1 // pred_check_branch
      %16 = sbr.rel (0) target = $region13
    $region12: #{tpu_custom_call.1} parent=1 // pred_region
      _
    $region13: #{tpu_custom_call.1} parent=1 // pred_fallthru
      _
    // Predicated region
    $region14: #{tpu_custom_call.1} parent=1 // pred_check
      _
    $region15: #{tpu_custom_call.1} parent=1 // pred_check_branch
      %18 = sbr.rel (0) target = $region17
    $region16: #{tpu_custom_call.1} parent=1 // pred_region
      _
    $region17: #{tpu_custom_call.1} parent=1 // pred_fallthru
      _
    // Predicated region
    $region18: #{tpu_custom_call.1} parent=1 // pred_check
      _
    $region19: #{tpu_custom_call.1} parent=1 // pred_check_branch
      %20 = sbr.rel (0) target = $region21
    $region20: #{tpu_custom_call.1} parent=1 // pred_region
      %22 = vsyncadd [#allocation4], 0
      %s24 = sshll.u32 %s4, 4
      %s25 = int_to_ptr.vmem [resolvable:$true] %s24
      %27 = dma.vmem_to_smem %s25, 16, [#allocation3], [#allocation4]
    $region21: #{tpu_custom_call.1} parent=1 // pred_fallthru
      _
    // Predicated region
    $region22: #{tpu_custom_call.1} parent=1 // pred_check
      _
    $region23: #{tpu_custom_call.1} parent=1 // pred_check_branch
      %29 = sbr.rel (0) target = $region25
    $region24: #{tpu_custom_call.1} parent=1 // pred_region
      %31 = dma.done [#allocation4], 16
    $region25: #{tpu_custom_call.1} parent=1 // pred_fallthru
      _
    %32 = sfence
    %v34 = vld [vmem:[%s0] sm:$0xf]
    %v35 = vld [vmem:[%s0 + $0x4] sm:$0xf]
    %v36 = vld [vmem:[%s1] sm:$0xf]
    %v37 = vld [vmem:[%s1 + $0xc] sm:$0xf]
    %v38 = vld [vmem:[%s1 + $0x18] sm:$0xf]
    %v39 = vld [vmem:[%s1 + $0x24] sm:$0xf]
    %v42 = vunpack.c.l.b16 %v34
    %v43 = vunpack.c.l.b16 %v35
    %v44 = vpack.c.b16 %v43, %v42
    %v49 = vunpack.c.l.b16 %v36
    %v50 = vunpack.c.l.b16 %v37
    %v51 = vunpack.c.l.b16 %v38
    %v52 = vunpack.c.l.b16 %v39
    %v53 = vpack.c.b16 %v50, %v49
    %v54 = vpack.c.b16 %v52, %v51
    %vm57 = vcmask 261120
    %v59 = vsel %vm57, %v44, 0
    %61 = vmatpush.bf16.msra.mxu0 0
    %62 = vmatpush.bf16.msra.mxu0 0
    %63 = vmatpush.bf16.msra.mxu0 0
    %64 = vmatpush.bf16.msra.mxu0 0
    %65 = vmatpush.bf16.msra.mxu0 0
    %66 = vmatpush.bf16.msra.mxu0 0
    %67 = vmatpush.bf16.msra.mxu0 %v54
    %68 = vmatpush.bf16.msra.mxu0 %v53
    %69 = vmatmul.bf16.gmra.mxu0 %v59
    %v70 = vpop.f32.mrf.mxu0
    %v71 = vadd.f32 0.0, %v70
    %v72 = vpop.f32.mrf.mxu0
    %v73 = vadd.f32 0.0, %v72
    %74 = vdwg.mxu0
    %75 = vst.msk [vmem:[#allocation2] sm:$0xff] %vm57, %v71
    %76 = vst.msk [vmem:[#allocation2 + $0x8] sm:$0xff] %vm57, %v73
    %79 = vrot.lane.b32.xlu0 %v71, 96
    %v80 = vpop.permute.xlu0 %79
    %81 = vrot.lane.b32.xlu0 %v73, 96
    %v82 = vpop.permute.xlu0 %81
    %85 = vst.msk [vmem:[#allocation2 + $0x10] sm:$0xff] %vm57, %v80
    %86 = vst.msk [vmem:[#allocation2 + $0x18] sm:$0xff] %vm57, %v82
    %87 = vrot.lane.b32.xlu0 %v71, 64
    %v88 = vpop.permute.xlu0 %87
    %89 = vrot.lane.b32.xlu0 %v73, 64
    %v90 = vpop.permute.xlu0 %89
    %93 = vst.msk [vmem:[#allocation2 + $0x20] sm:$0xff] %vm57, %v88
    %94 = vst.msk [vmem:[#allocation2 + $0x28] sm:$0xff] %vm57, %v90
    %v95 = vld [vmem:[%s0 + $0x8] sm:$0xf]
    %v96 = vld [vmem:[%s0 + $0xc] sm:$0xf]
    %v97 = vld [vmem:[%s1] sm:$0xf]
    %v98 = vld [vmem:[%s1 + $0xc] sm:$0xf]
    %v99 = vld [vmem:[%s1 + $0x18] sm:$0xf]
    %v100 = vld [vmem:[%s1 + $0x24] sm:$0xf]
    %v103 = vunpack.c.l.b16 %v95
    %v104 = vunpack.c.l.b16 %v96
    %v105 = vpack.c.b16 %v104, %v103
    %v110 = vunpack.c.l.b16 %v97
    %v111 = vunpack.c.l.b16 %v98
    %v112 = vunpack.c.l.b16 %v99
    %v113 = vunpack.c.l.b16 %v100
    %v114 = vpack.c.b16 %v111, %v110
    %v115 = vpack.c.b16 %v113, %v112
    %116 = vrot.lane.b32.xlu0 %v114, 32
    %v117 = vpop.permute.xlu0 %116
    %118 = vrot.lane.b32.xlu0 %v115, 32
    %v119 = vpop.permute.xlu0 %118
    %v123 = vsel %vm57, %v105, 0
    %125 = vmatpush.bf16.msra.mxu0 0
    %126 = vmatpush.bf16.msra.mxu0 0
    %127 = vmatpush.bf16.msra.mxu0 0
    %128 = vmatpush.bf16.msra.mxu0 0
    %129 = vmatpush.bf16.msra.mxu0 0
    %130 = vmatpush.bf16.msra.mxu0 0
    %131 = vmatpush.bf16.msra.mxu0 %v119
    %132 = vmatpush.bf16.msra.mxu0 %v117
    %133 = vmatmul.bf16.gmra.mxu0 %v123
    %v134 = vpop.f32.mrf.mxu0
    %v135 = vadd.f32 0.0, %v134
    %v136 = vpop.f32.mrf.mxu0
    %v137 = vadd.f32 0.0, %v136
    %138 = vdwg.mxu0
    %139 = vst.msk [vmem:[#allocation2 + $0x30] sm:$0xff] %vm57, %v135
    %140 = vst.msk [vmem:[#allocation2 + $0x38] sm:$0xff] %vm57, %v137
    %v141 = vld [vmem:[%s0 + $0x10] sm:$0xf]
    %v142 = vld [vmem:[%s0 + $0x14] sm:$0xf]
    %v143 = vld [vmem:[%s1 + $0x4] sm:$0xf]
    %v144 = vld [vmem:[%s1 + $0x10] sm:$0xf]
    %v145 = vld [vmem:[%s1 + $0x1c] sm:$0xf]
    %v146 = vld [vmem:[%s1 + $0x28] sm:$0xf]
    %v149 = vunpack.c.l.b16 %v141
    %v150 = vunpack.c.l.b16 %v142
    %v151 = vpack.c.b16 %v150, %v149
    %v156 = vunpack.c.l.b16 %v143
    %v157 = vunpack.c.l.b16 %v144
    %v158 = vunpack.c.l.b16 %v145
    %v159 = vunpack.c.l.b16 %v146
    %v160 = vpack.c.b16 %v157, %v156
    %v161 = vpack.c.b16 %v159, %v158
    %v165 = vsel %vm57, %v151, 0
    %167 = vmatpush.bf16.msra.mxu0 0
    %168 = vmatpush.bf16.msra.mxu0 0
    %169 = vmatpush.bf16.msra.mxu0 0
    %170 = vmatpush.bf16.msra.mxu0 0
    %171 = vmatpush.bf16.msra.mxu0 0
    %172 = vmatpush.bf16.msra.mxu0 0
    %173 = vmatpush.bf16.msra.mxu0 %v161
    %174 = vmatpush.bf16.msra.mxu0 %v160
    %175 = vmatmul.bf16.gmra.mxu0 %v165
    %v176 = vpop.f32.mrf.mxu0
    %v177 = vadd.f32 0.0, %v176
    %v178 = vpop.f32.mrf.mxu0
    %v179 = vadd.f32 0.0, %v178
    %180 = vdwg.mxu0
    %181 = vst.msk [vmem:[#allocation2 + $0x40] sm:$0xff] %vm57, %v177
    %182 = vst.msk [vmem:[#allocation2 + $0x48] sm:$0xff] %vm57, %v179
    %185 = vrot.lane.b32.xlu0 %v177, 96
    %v186 = vpop.permute.xlu0 %185
    %187 = vrot.lane.b32.xlu0 %v179, 96
    %v188 = vpop.permute.xlu0 %187
    %191 = vst.msk [vmem:[#allocation2 + $0x50] sm:$0xff] %vm57, %v186
    %192 = vst.msk [vmem:[#allocation2 + $0x58] sm:$0xff] %vm57, %v188
    %v193 = vld [vmem:[%s0 + $0x18] sm:$0xf]
    %v194 = vld [vmem:[%s0 + $0x1c] sm:$0xf]
    %v195 = vld [vmem:[%s1 + $0x4] sm:$0xf]
    %v196 = vld [vmem:[%s1 + $0x10] sm:$0xf]
    %v197 = vld [vmem:[%s1 + $0x1c] sm:$0xf]
    %v198 = vld [vmem:[%s1 + $0x28] sm:$0xf]
    %v201 = vunpack.c.l.b16 %v193
    %v202 = vunpack.c.l.b16 %v194
    %v203 = vpack.c.b16 %v202, %v201
    %v208 = vunpack.c.l.b16 %v195
    %v209 = vunpack.c.l.b16 %v196
    %v210 = vunpack.c.l.b16 %v197
    %v211 = vunpack.c.l.b16 %v198
    %v212 = vpack.c.b16 %v209, %v208
    %v213 = vpack.c.b16 %v211, %v210
    %214 = vrot.lane.b32.xlu0 %v212, 64
    %v215 = vpop.permute.xlu0 %214
    %216 = vrot.lane.b32.xlu0 %v213, 64
    %v217 = vpop.permute.xlu0 %216
    %v221 = vsel %vm57, %v203, 0
    %223 = vmatpush.bf16.msra.mxu0 0
    %224 = vmatpush.bf16.msra.mxu0 0
    %225 = vmatpush.bf16.msra.mxu0 0
    %226 = vmatpush.bf16.msra.mxu0 0
    %227 = vmatpush.bf16.msra.mxu0 0
    %228 = vmatpush.bf16.msra.mxu0 0
    %229 = vmatpush.bf16.msra.mxu0 %v217
    %230 = vmatpush.bf16.msra.mxu0 %v215
    %231 = vmatmul.bf16.gmra.mxu0 %v221
    %v232 = vpop.f32.mrf.mxu0
    %v233 = vadd.f32 0.0, %v232
    %v234 = vpop.f32.mrf.mxu0
    %v235 = vadd.f32 0.0, %v234
    %236 = vdwg.mxu0
    %237 = vst.msk [vmem:[#allocation2 + $0x60] sm:$0xff] %vm57, %v233
    %238 = vst.msk [vmem:[#allocation2 + $0x68] sm:$0xff] %vm57, %v235
    %241 = vrot.lane.b32.xlu0 %v233, 96
    %v242 = vpop.permute.xlu0 %241
    %243 = vrot.lane.b32.xlu0 %v235, 96
    %v244 = vpop.permute.xlu0 %243
    %247 = vst.msk [vmem:[#allocation2 + $0x70] sm:$0xff] %vm57, %v242
    %248 = vst.msk [vmem:[#allocation2 + $0x78] sm:$0xff] %vm57, %v244
    %v249 = vld [vmem:[%s0 + $0x20] sm:$0xf]
    %v250 = vld [vmem:[%s0 + $0x24] sm:$0xf]
    %v251 = vld [vmem:[%s1 + $0x8] sm:$0xf]
    %v252 = vld [vmem:[%s1 + $0x14] sm:$0xf]
    %v253 = vld [vmem:[%s1 + $0x20] sm:$0xf]
    %v254 = vld [vmem:[%s1 + $0x2c] sm:$0xf]
    %v257 = vunpack.c.l.b16 %v249
    %v258 = vunpack.c.l.b16 %v250
    %v259 = vpack.c.b16 %v258, %v257
    %v264 = vunpack.c.l.b16 %v251
    %v265 = vunpack.c.l.b16 %v252
    %v266 = vunpack.c.l.b16 %v253
    %v267 = vunpack.c.l.b16 %v254
    %v268 = vpack.c.b16 %v265, %v264
    %v269 = vpack.c.b16 %v267, %v266
    %v273 = vsel %vm57, %v259, 0
    %275 = vmatpush.bf16.msra.mxu0 0
    %276 = vmatpush.bf16.msra.mxu0 0
    %277 = vmatpush.bf16.msra.mxu0 0
    %278 = vmatpush.bf16.msra.mxu0 0
    %279 = vmatpush.bf16.msra.mxu0 0
    %280 = vmatpush.bf16.msra.mxu0 0
    %281 = vmatpush.bf16.msra.mxu0 %v269
    %282 = vmatpush.bf16.msra.mxu0 %v268
    %283 = vmatmul.bf16.gmra.mxu0 %v273
    %v284 = vpop.f32.mrf.mxu0
    %v285 = vadd.f32 0.0, %v284
    %v286 = vpop.f32.mrf.mxu0
    %v287 = vadd.f32 0.0, %v286
    %288 = vdwg.mxu0
    %289 = vst.msk [vmem:[#allocation2 + $0x80] sm:$0xff] %vm57, %v285
    %290 = vst.msk [vmem:[#allocation2 + $0x88] sm:$0xff] %vm57, %v287
    %v291 = vld [vmem:[%s2] sm:$0xff]
    %v292 = vld [vmem:[%s2 + $0x8] sm:$0xff]
    %v293 = vld [vmem:[%s2 + $0x10] sm:$0xff]
    %v294 = vld [vmem:[%s2 + $0x18] sm:$0xff]
    %v295 = vld [vmem:[%s2 + $0x20] sm:$0xff]
    %v296 = vld [vmem:[%s2 + $0x28] sm:$0xff]
    %v297 = vld [vmem:[%s2 + $0x30] sm:$0xff]
    %v298 = vld [vmem:[%s2 + $0x38] sm:$0xff]
    %v299 = vld [vmem:[%s2 + $0x40] sm:$0xff]
    %v300 = vld [vmem:[%s2 + $0x48] sm:$0xff]
    %v301 = vunpack.c.l.bf16 %v291
    %v302 = vunpack.c.h.bf16 %v291
    %v303 = vunpack.c.l.bf16 %v292
    %v304 = vunpack.c.h.bf16 %v292
    %v305 = vunpack.c.l.bf16 %v293
    %v306 = vunpack.c.h.bf16 %v293
    %v307 = vunpack.c.l.bf16 %v294
    %v308 = vunpack.c.h.bf16 %v294
    %v309 = vunpack.c.l.bf16 %v295
    %v310 = vunpack.c.h.bf16 %v295
    %v311 = vunpack.c.l.bf16 %v296
    %v312 = vunpack.c.h.bf16 %v296
    %v313 = vunpack.c.l.bf16 %v297
    %v314 = vunpack.c.h.bf16 %v297
    %v315 = vunpack.c.l.bf16 %v298
    %v316 = vunpack.c.h.bf16 %v298
    %v317 = vunpack.c.l.bf16 %v299
    %v318 = vunpack.c.h.bf16 %v299
    %v319 = vunpack.c.l.bf16 %v300
    %v320 = vunpack.c.h.bf16 %v300
    %v321 = vld [vmem:[#allocation2] sm:$0xff]
    %v322 = vld [vmem:[#allocation2 + $0x8] sm:$0xff]
    %v323 = vld [vmem:[#allocation2 + $0x10] sm:$0xff]
    %v324 = vld [vmem:[#allocation2 + $0x18] sm:$0xff]
    %v325 = vld [vmem:[#allocation2 + $0x20] sm:$0xff]
    %v326 = vld [vmem:[#allocation2 + $0x28] sm:$0xff]
    %v327 = vld [vmem:[#allocation2 + $0x30] sm:$0xff]
    %v328 = vld [vmem:[#allocation2 + $0x38] sm:$0xff]
    %v329 = vld [vmem:[#allocation2 + $0x40] sm:$0xff]
    %v330 = vld [vmem:[#allocation2 + $0x48] sm:$0xff]
    %v331 = vld [vmem:[#allocation2 + $0x50] sm:$0xff]
    %v332 = vld [vmem:[#allocation2 + $0x58] sm:$0xff]
    %v333 = vld [vmem:[#allocation2 + $0x60] sm:$0xff]
    %v334 = vld [vmem:[#allocation2 + $0x68] sm:$0xff]
    %v335 = vld [vmem:[#allocation2 + $0x70] sm:$0xff]
    %v336 = vld [vmem:[#allocation2 + $0x78] sm:$0xff]
    %v337 = vld [vmem:[#allocation2 + $0x80] sm:$0xff]
    %v338 = vld [vmem:[#allocation2 + $0x88] sm:$0xff]
    %vm339 = vcmask 130048
    %v341 = vsel %vm339, %v302, 0
    %v344 = vsel %vm339, %v304, 0
    %v347 = vsel %vm339, %v306, 0
    %v350 = vsel %vm339, %v308, 0
    %v353 = vsel %vm339, %v310, 0
    %v356 = vsel %vm339, %v312, 0
    %v359 = vsel %vm339, %v314, 0
    %v362 = vsel %vm339, %v316, 0
    %v365 = vsel %vm339, %v318, 0
    %v368 = vsel %vm339, %v320, 0
    %370 = vmatpush.msra.mxu0 %v336
    %371 = vmatpush.msra.mxu0 %v335
    %372 = vmatpush.msra.mxu0 %v334
    %373 = vmatpush.msra.mxu0 %v333
    %374 = vmatpush.msra.mxu0 %v332
    %375 = vmatpush.msra.mxu0 %v331
    %376 = vmatpush.msra.mxu0 %v330
    %377 = vmatpush.msra.mxu0 %v329
    %378 = vmatpush.msra.mxu0 %v328
    %379 = vmatpush.msra.mxu0 %v327
    %380 = vmatpush.msra.mxu0 %v326
    %381 = vmatpush.msra.mxu0 %v325
    %382 = vmatpush.msra.mxu0 %v324
    %383 = vmatpush.msra.mxu0 %v323
    %384 = vmatpush.msra.mxu0 %v322
    %385 = vmatpush.msra.mxu0 %v321
    %386 = vmatmul.f32.gmra.mxu0 %v301
    %v387 = vpop.f32.mrf.mxu0
    %v388 = vadd.f32 0.0, %v387
    %389 = vmatmul.f32.gmra.mxu0 %v303
    %v390 = vpop.f32.mrf.mxu0
    %v391 = vadd.f32 0.0, %v390
    %392 = vmatmul.f32.gmra.mxu0 %v305
    %v393 = vpop.f32.mrf.mxu0
    %v394 = vadd.f32 0.0, %v393
    %395 = vmatmul.f32.gmra.mxu0 %v307
    %v396 = vpop.f32.mrf.mxu0
    %v397 = vadd.f32 0.0, %v396
    %398 = vmatmul.f32.gmra.mxu0 %v309
    %v399 = vpop.f32.mrf.mxu0
    %v400 = vadd.f32 0.0, %v399
    %401 = vmatmul.f32.gmra.mxu0 %v311
    %v402 = vpop.f32.mrf.mxu0
    %v403 = vadd.f32 0.0, %v402
    %404 = vmatmul.f32.gmra.mxu0 %v313
    %v405 = vpop.f32.mrf.mxu0
    %v406 = vadd.f32 0.0, %v405
    %407 = vmatmul.f32.gmra.mxu0 %v315
    %v408 = vpop.f32.mrf.mxu0
    %v409 = vadd.f32 0.0, %v408
    %410 = vmatmul.f32.gmra.mxu0 %v317
    %v411 = vpop.f32.mrf.mxu0
    %v412 = vadd.f32 0.0, %v411
    %413 = vmatmul.f32.gmra.mxu0 %v319
    %v414 = vpop.f32.mrf.mxu0
    %v415 = vadd.f32 0.0, %v414
    %416 = vdwg.mxu0
    %417 = vmatpush.msra.mxu0 0.0
    %418 = vmatpush.msra.mxu0 0.0
    %419 = vmatpush.msra.mxu0 0.0
    %420 = vmatpush.msra.mxu0 0.0
    %421 = vmatpush.msra.mxu0 0.0
    %422 = vmatpush.msra.mxu0 0.0
    %423 = vmatpush.msra.mxu0 0.0
    %424 = vmatpush.msra.mxu0 0.0
    %425 = vmatpush.msra.mxu0 0.0
    %426 = vmatpush.msra.mxu0 0.0
    %427 = vmatpush.msra.mxu0 0.0
    %428 = vmatpush.msra.mxu0 0.0
    %429 = vmatpush.msra.mxu0 0.0
    %430 = vmatpush.msra.mxu0 0.0
    %431 = vmatpush.msra.mxu0 %v338
    %432 = vmatpush.msra.mxu0 %v337
    %433 = vmatmul.f32.gmra.mxu0 %v341
    %v434 = vpop.f32.mrf.mxu0
    %v435 = vadd.f32 %v388, %v434
    %436 = vmatmul.f32.gmra.mxu0 %v344
    %v437 = vpop.f32.mrf.mxu0
    %v438 = vadd.f32 %v391, %v437
    %439 = vmatmul.f32.gmra.mxu0 %v347
    %v440 = vpop.f32.mrf.mxu0
    %v441 = vadd.f32 %v394, %v440
    %442 = vmatmul.f32.gmra.mxu0 %v350
    %v443 = vpop.f32.mrf.mxu0
    %v444 = vadd.f32 %v397, %v443
    %445 = vmatmul.f32.gmra.mxu0 %v353
    %v446 = vpop.f32.mrf.mxu0
    %v447 = vadd.f32 %v400, %v446
    %448 = vmatmul.f32.gmra.mxu0 %v356
    %v449 = vpop.f32.mrf.mxu0
    %v450 = vadd.f32 %v403, %v449
    %451 = vmatmul.f32.gmra.mxu0 %v359
    %v452 = vpop.f32.mrf.mxu0
    %v453 = vadd.f32 %v406, %v452
    %454 = vmatmul.f32.gmra.mxu0 %v362
    %v455 = vpop.f32.mrf.mxu0
    %v456 = vadd.f32 %v409, %v455
    %457 = vmatmul.f32.gmra.mxu0 %v365
    %v458 = vpop.f32.mrf.mxu0
    %v459 = vadd.f32 %v412, %v458
    %460 = vmatmul.f32.gmra.mxu0 %v368
    %v461 = vpop.f32.mrf.mxu0
    %v462 = vadd.f32 %v415, %v461
    %463 = vdwg.mxu0
    %v464 = vlaneseq
    %v465 = vshrl.u32 %v464, 7
    %v466 = vadd.s32 %v465, 8
    %v467 = vld [vmem:[%s3] sm:$0x1]
    %v468 = vperm.slane %v467, 0
    %v469 = vadd.f32 %v435, %v468
    %v470 = vadd.f32 %v438, %v468
    %s471 = sld [smem:[#allocation3]]
    %vm472 = vcmp.gt.f32.partialorder %v469, 0.0
    %vm473 = vcmp.gt.f32.partialorder %v470, 0.0
    %v474 = vstv %s471
    %v475 = vmul.f32 %v474, %v469
    %v476 = vmul.f32 %v474, %v470
    %v477 = vsel %vm472, %v469, %v475
    %v478 = vsel %vm473, %v470, %v476
    %vm479 = vcmp.lt.s32.totalorder %v465, 12
    %vm480 = vcmp.lt.s32.totalorder %v466, 12
    %v481 = vsel %vm479, %v477, 0.0
    %v482 = vsel %vm480, %v478, 0.0
    %483 = vst.msk [vmem:[%s5] sm:$0xff] %vm57, %v481
    %484 = vst.msk [vmem:[%s5 + $0x8] sm:$0xff] %vm57, %v482
    %v485 = vld [vmem:[%s3 + $0x1] sm:$0x1]
    %v486 = vperm.slane %v485, 0
    %v487 = vadd.f32 %v441, %v486
    %v488 = vadd.f32 %v444, %v486
    %s489 = sld [smem:[#allocation3 + $0x1]]
    %vm490 = vcmp.gt.f32.partialorder %v487, 0.0
    %vm491 = vcmp.gt.f32.partialorder %v488, 0.0
    %v492 = vstv %s489
    %v493 = vmul.f32 %v492, %v487
    %v494 = vmul.f32 %v492, %v488
    %v495 = vsel %vm490, %v487, %v493
    %v496 = vsel %vm491, %v488, %v494
    %vm497 = vcmp.lt.s32.totalorder %v465, 10
    %vm498 = vcmp.lt.s32.totalorder %v466, 10
    %v499 = vsel %vm497, %v495, 0.0
    %v500 = vsel %vm498, %v496, 0.0
    %501 = vst.msk [vmem:[%s5 + $0x10] sm:$0xff] %vm57, %v499
    %502 = vst.msk [vmem:[%s5 + $0x18] sm:$0xff] %vm57, %v500
    %v503 = vld [vmem:[%s3 + $0x2] sm:$0x1]
    %v504 = vperm.slane %v503, 0
    %v505 = vadd.f32 %v447, %v504
    %v506 = vadd.f32 %v450, %v504
    %s507 = sld [smem:[#allocation3 + $0x2]]
    %vm508 = vcmp.gt.f32.partialorder %v505, 0.0
    %vm509 = vcmp.gt.f32.partialorder %v506, 0.0
    %v510 = vstv %s507
    %v511 = vmul.f32 %v510, %v505
    %v512 = vmul.f32 %v510, %v506
    %v513 = vsel %vm508, %v505, %v511
    %v514 = vsel %vm509, %v506, %v512
    %vm515 = vcmp.lt.s32.totalorder %v465, 14
    %vm516 = vcmp.lt.s32.totalorder %v466, 14
    %v517 = vsel %vm515, %v513, 0.0
    %v518 = vsel %vm516, %v514, 0.0
    %519 = vst.msk [vmem:[%s5 + $0x20] sm:$0xff] %vm57, %v517
    %520 = vst.msk [vmem:[%s5 + $0x28] sm:$0xff] %vm57, %v518
    %v521 = vld [vmem:[%s3 + $0x3] sm:$0x1]
    %v522 = vperm.slane %v521, 0
    %v523 = vadd.f32 %v453, %v522
    %v524 = vadd.f32 %v456, %v522
    %s525 = sld [smem:[#allocation3 + $0x3]]
    %vm526 = vcmp.gt.f32.partialorder %v523, 0.0
    %vm527 = vcmp.gt.f32.partialorder %v524, 0.0
    %v528 = vstv %s525
    %v529 = vmul.f32 %v528, %v523
    %v530 = vmul.f32 %v528, %v524
    %v531 = vsel %vm526, %v523, %v529
    %v532 = vsel %vm527, %v524, %v530
    %vm533 = vcmp.lt.s32.totalorder %v465, 9
    %vm534 = vcmp.lt.s32.totalorder %v466, 9
    %v535 = vsel %vm533, %v531, 0.0
    %v536 = vsel %vm534, %v532, 0.0
    %537 = vst.msk [vmem:[%s5 + $0x30] sm:$0xff] %vm57, %v535
    %538 = vst.msk [vmem:[%s5 + $0x38] sm:$0xff] %vm57, %v536
    %v539 = vld [vmem:[%s3 + $0x4] sm:$0x1]
    %v540 = vperm.slane %v539, 0
    %v541 = vadd.f32 %v459, %v540
    %v542 = vadd.f32 %v462, %v540
    %s543 = sld [smem:[#allocation3 + $0x4]]
    %vm544 = vcmp.gt.f32.partialorder %v541, 0.0
    %vm545 = vcmp.gt.f32.partialorder %v542, 0.0
    %v546 = vstv %s543
    %v547 = vmul.f32 %v546, %v541
    %v548 = vmul.f32 %v546, %v542
    %v549 = vsel %vm544, %v541, %v547
    %v550 = vsel %vm545, %v542, %v548
    %vm551 = vcmp.lt.s32.totalorder %v465, 11
    %vm552 = vcmp.lt.s32.totalorder %v466, 11
    %v553 = vsel %vm551, %v549, 0.0
    %v554 = vsel %vm552, %v550, 0.0
    %555 = vst.msk [vmem:[%s5 + $0x40] sm:$0xff] %vm57, %v553
    %556 = vst.msk [vmem:[%s5 + $0x48] sm:$0xff] %vm57, %v554
    // Predicated region
    $region26: #{tpu_custom_call.1} parent=1 // pred_check
      _
    $region27: #{tpu_custom_call.1} parent=1 // pred_check_branch
      %558 = sbr.rel (0) target = $region29
    $region28: #{tpu_custom_call.1} parent=1 // pred_region
      _
    $region29: #{tpu_custom_call.1} parent=1 // pred_fallthru
      _
    // Predicated region
    $region30: #{tpu_custom_call.1} parent=1 // pred_check
      _
    $region31: #{tpu_custom_call.1} parent=1 // pred_check_branch
      %560 = sbr.rel (0) target = $region33
    $region32: #{tpu_custom_call.1} parent=1 // pred_region
      _
    $region33: #{tpu_custom_call.1} parent=1 // pred_fallthru
      _
    %561 = vsyncpa [#allocation4], 1

</llo_original>
